<compile_context>
chip_gen: v6e
topology: v6e:2x2x1
jax: 0.10.0
libtpu: 0.0.40
codegen_flags: <defaults>
</compile_context>

<pallas_src>
import jax
import jax.numpy as jnp
from jax.experimental import pallas as pl
from jax.experimental.pallas import tpu as pltpu


def _round_up(x, m):
    return ((x + m - 1) // m) * m


def _phm_matmul_kernel(x_ref, h_ref, b_ref, y_ref):
    """One (row-tile, out-tile) block of y = x @ H + b.

    x_ref : VMEM (tile_n, in_pad)       current row tile (streamed)
    h_ref : VMEM (in_pad, tile_out)     Kronecker-sum weight tile (resident
                                        when out fits in one tile)
    b_ref : VMEM (1, tile_out), float32
    y_ref : VMEM (tile_n, tile_out)
    """
    acc = jnp.dot(x_ref[...], h_ref[...], preferred_element_type=jnp.float32)
    acc = acc + b_ref[...]                    # bias add in f32
    y_ref[...] = acc.astype(y_ref.dtype)


def phm_forward(x, phm_rule, W, b=None, *, tile_n=512,
                force_bf16_matmul=False, interpret=False):
    """PHMLayer forward: y = x @ (sum_p kron(phm_rule[p], W[p])) + b.

    x: (..., in_features) -> (..., out_features). Output dtype follows
    x.dtype; MXU accumulation is always f32. If force_bf16_matmul is set the
    matmul operands are carried in bf16 regardless of x.dtype (deliberate
    precision trade for ~2-3x MXU throughput and half the H footprint).
    """
    phm_dim, in_per, out_per = W.shape
    in_features = phm_dim * in_per
    out_features = phm_dim * out_per
    assert x.shape[-1] == in_features

    out_dtype = x.dtype
    compute_dtype = jnp.bfloat16 if force_bf16_matmul else x.dtype
    c_item = jnp.dtype(compute_dtype).itemsize
    o_item = jnp.dtype(out_dtype).itemsize

    if b is None:
        b = jnp.zeros((out_features,), dtype=jnp.float32)

    # Kronecker-product sum, hoisted to the wrapper (tiny O(D*in*out) work):
    # H[q*in_per + i, r*out_per + j] = sum_p phm_rule[p, q, r] * W[p, i, j]
    H = jnp.einsum(
        "pqr,pij->qirj",
        phm_rule.astype(jnp.float32),
        W.astype(jnp.float32),
    ).reshape(in_features, out_features)

    # --- Feature-dim padding / output tiling --------------------------------
    in_pad = _round_up(in_features, 128)               # aligned MXU K depth
    out_lane = _round_up(out_features, 128)
    # Keep H fully resident (single VMEM buffer) when small; otherwise tile
    # the output features so per-step VMEM stays bounded (v7x: 64 MiB VMEM).
    if in_pad * out_lane * c_item <= (8 << 20):
        tile_out = out_lane
    else:
        tile_out = min(512, out_lane)
    out_pad = _round_up(out_features, tile_out)
    n_out_tiles = out_pad // tile_out
    resident = (n_out_tiles == 1)

    H = jnp.pad(H, ((0, in_pad - in_features), (0, out_pad - out_features)))
    H = H.astype(compute_dtype)
    b_p = jnp.pad(b.astype(jnp.float32),
                  (0, out_pad - out_features)).reshape(1, out_pad)

    # --- Row (N) tiling ------------------------------------------------------
    lead = x.shape[:-1]
    x2 = x.reshape(-1, in_features).astype(compute_dtype)
    n = x2.shape[0]

    # Sublane/packing granularity: 8 rows f32, 16 bf16, 32 int8/fp8.
    sub = max(8, 32 // c_item)
    n_rows = _round_up(max(n, 1), sub)
    tile_n = max(sub, min(_round_up(tile_n, sub), n_rows))

    # VMEM budgeting: shrink tile_n if the per-step working set gets too big.
    h_bufs = 1 if resident else 2

    def vmem_est(tn):
        return (2 * tn * in_pad * c_item            # x tile, double-buffered
                + 2 * tn * tile_out * o_item        # y tile, double-buffered
                + h_bufs * in_pad * tile_out * c_item
                + 2 * tile_out * 4)                 # bias

    while tile_n > sub and vmem_est(tile_n) > (40 << 20):
        tile_n = max(sub, (tile_n // 2 // sub) * sub)

    vmem_limit = int(min(64 << 20,
                         max(32 << 20, int(vmem_est(tile_n) * 1.3) + (2 << 20))))

    # Pad rows only to the packing granularity; the grid uses cdiv so a near
    # tile boundary does not double the work (last block is edge-masked).
    x2 = jnp.pad(x2, ((0, n_rows - n), (0, in_pad - in_features)))

    grid = (pl.cdiv(n_rows, tile_n), n_out_tiles)

    # Single-buffer the resident operands (constant index_map => double
    # buffering buys nothing and wastes VMEM).
    res_kwargs = {"pipeline_mode": pl.Buffered(1)} if resident else {}

    y = pl.pallas_call(
        _phm_matmul_kernel,
        out_shape=jax.ShapeDtypeStruct((n_rows, out_pad), out_dtype),
        grid_spec=pltpu.PrefetchScalarGridSpec(
            num_scalar_prefetch=0,
            grid=grid,
            in_specs=[
                pl.BlockSpec((tile_n, in_pad), lambda i, j: (i, 0)),     # x tile
                pl.BlockSpec((in_pad, tile_out), lambda i, j: (0, j),
                             **res_kwargs),                              # H
                pl.BlockSpec((1, tile_out), lambda i, j: (0, j),
                             **res_kwargs),                              # bias
            ],
            out_specs=pl.BlockSpec((tile_n, tile_out), lambda i, j: (i, j)),
        ),
        compiler_params=pltpu.CompilerParams(
            # Row tiles and output tiles are independent -> both parallel
            # (megacore sharding on v7x).
            dimension_semantics=("parallel", "parallel"),
            vmem_limit_bytes=vmem_limit,
        ),
        interpret=interpret,
    )(x2, H, b_p)

    return y[:n, :out_features].reshape(lead + (out_features,))


def phm_reference(x, phm_rule, W, b):
    """Pure-JAX reference matching the PyTorch forward exactly."""
    H = jnp.einsum("pqr,pij->qirj", phm_rule, W)
    H = H.reshape(phm_rule.shape[1] * W.shape[1],
                  phm_rule.shape[2] * W.shape[2])
    y = jnp.matmul(x, H, precision=jax.lax.Precision.HIGHEST)
    return y + b if b is not None else y


if __name__ == "__main__":
    # Small, module-consistent shapes.
    phm_dim = 4
    in_features = 32
    out_features = 32
    batch, seq = 2, 8
    phm_init_range = 0.0001

    in_per = in_features // phm_dim
    out_per = out_features // phm_dim

    key = jax.random.PRNGKey(0)
    k_x, k_rule, k_w = jax.random.split(key, 3)

    x = jax.random.normal(k_x, (batch, seq, in_features), dtype=jnp.float32)
    # phm_rule ~ Normal(0, 0.01)    (phm_c_init='normal')
    phm_rule = 0.01 * jax.random.normal(
        k_rule, (phm_dim, phm_dim, phm_dim), dtype=jnp.float32)
    # W ~ Normal(0, phm_init_range) (hypercomplex_nonlinearity='normal', non-factorized)
    W = phm_init_range * jax.random.normal(
        k_w, (phm_dim, in_per, out_per), dtype=jnp.float32)
    # b = zeros                     (phm_bias=True)
    b = jnp.zeros((out_features,), dtype=jnp.float32)

    y_ref = phm_reference(x, phm_rule, W, b)

    # float32 path (exact-ish check).
    y = jax.block_until_ready(phm_forward(x, phm_rule, W, b))
    assert y.shape == (batch, seq, out_features)
    assert jnp.allclose(y, y_ref, atol=1e-7, rtol=1e-3)

    # bfloat16 input path (halved HBM traffic, f32 MXU accumulation).
    y_bf16 = jax.block_until_ready(
        phm_forward(x.astype(jnp.bfloat16), phm_rule, W, b))
    assert y_bf16.shape == (batch, seq, out_features)
    assert jnp.all(jnp.isfinite(y_bf16.astype(jnp.float32)))
    assert jnp.allclose(y_bf16.astype(jnp.float32), y_ref,
                        atol=2e-6, rtol=2.5e-1)

    # f32 input with the bf16-MXU flag (precision trade exposed as a flag).
    y_fast = jax.block_until_ready(
        phm_forward(x, phm_rule, W, b, force_bf16_matmul=True))
    assert y_fast.shape == (batch, seq, out_features)
    assert jnp.allclose(y_fast, y_ref, atol=2e-6, rtol=2.5e-1)

    print("KERNEL_OK")
</pallas_src>

<mosaic_0001>
module attributes {stable_mosaic.version = 11 : i64} {
  func.func @_phm_matmul_kernel(%arg0: i32, %arg1: i32, %arg2: memref<16x128xf32, #tpu.memory_space<vmem>>, %arg3: memref<128x128xf32, #tpu.memory_space<vmem>>, %arg4: memref<1x128xf32, #tpu.memory_space<vmem>>, %arg5: memref<16x128xf32, #tpu.memory_space<vmem>>) attributes {dimension_semantics = [#tpu.dimension_semantics<parallel>, #tpu.dimension_semantics<parallel>], iteration_bounds = array<i64: 1, 1>, scalar_prefetch = 0 : i64, scratch_operands = 0 : i64, tpu.core_type = #tpu.core_type<tc>, window_params = [{transform_indices = @transform_0, window_bounds = array<i64: 16, 128>}, {pipeline_mode = #tpu.pipeline_mode<synchronous>, transform_indices = @transform_1, window_bounds = array<i64: 128, 128>}, {pipeline_mode = #tpu.pipeline_mode<synchronous>, transform_indices = @transform_2, window_bounds = array<i64: 1, 128>}, {transform_indices = @transform_3, window_bounds = array<i64: 16, 128>}]} {
    %c0 = arith.constant 0 : index
    %c0_0 = arith.constant 0 : index
    %0 = vector.load %arg2[%c0, %c0_0] : memref<16x128xf32, #tpu.memory_space<vmem>>, vector<16x128xf32>
    %c0_1 = arith.constant 0 : index
    %c0_2 = arith.constant 0 : index
    %1 = vector.load %arg3[%c0_1, %c0_2] : memref<128x128xf32, #tpu.memory_space<vmem>>, vector<128x128xf32>
    %cst = arith.constant dense<0.000000e+00> : vector<16x128xf32>
    %2 = tpu.matmul %0, %1, %cst {dimension_numbers = #tpu.dot_dimension_numbers<[1], [0], [0], [1], [0, 0, 1, 1], [], []>} : vector<16x128xf32>, vector<128x128xf32>, vector<16x128xf32> -> vector<16x128xf32>
    %c0_3 = arith.constant 0 : index
    %c0_4 = arith.constant 0 : index
    %3 = vector.load %arg4[%c0_3, %c0_4] : memref<1x128xf32, #tpu.memory_space<vmem>>, vector<1x128xf32>
    %4 = vector.broadcast %3 : vector<1x128xf32> to vector<16x128xf32>
    %5 = arith.addf %2, %4 : vector<16x128xf32>
    %c0_5 = arith.constant 0 : index
    %c0_6 = arith.constant 0 : index
    %6 = vector.load %arg5[%c0_5, %c0_6] : memref<16x128xf32, #tpu.memory_space<vmem>>, vector<16x128xf32>
    tpu.vector_store %arg5[%c0_5, %c0_6], %5 {strides = array<i32>} : memref<16x128xf32, #tpu.memory_space<vmem>>, vector<16x128xf32>,
    return
  }
  func.func @transform_0(%arg0: i32, %arg1: i32) -> (i32, i32) {
    %c0_i32 = arith.constant 0 : i32
    %c0_i32_0 = arith.constant 0 : i32
    return %arg0, %c0_i32 : i32, i32
  }
  func.func @transform_1(%arg0: i32, %arg1: i32) -> (i32, i32) {
    %c0_i32 = arith.constant 0 : i32
    %c0_i32_0 = arith.constant 0 : i32
    return %c0_i32, %arg1 : i32, i32
  }
  func.func @transform_2(%arg0: i32, %arg1: i32) -> (i32, i32) {
    %c0_i32 = arith.constant 0 : i32
    %c0_i32_0 = arith.constant 0 : i32
    return %c0_i32, %arg1 : i32, i32
  }
  func.func @transform_3(%arg0: i32, %arg1: i32) -> (i32, i32) {
    %c0_i32 = arith.constant 0 : i32
    return %arg0, %arg1 : i32, i32
  }
}

</mosaic_0001>

<llo_original>
// kernel: tpu_custom_call.1
$region0: #{tpu_custom_call.1}
  #allocation0 [shape = 'u32[]', space=smem, size = 0x4, offset = 0x4, fixed_abs, tag = 'smem constant byte address 0x4 - core index']
  #allocation1 [shape = 'u32[144,128]{1,0:T(1,128)}', space=vmem, size = 0x12000, scoped, tag = 'internal scratch']
  %s0 = inlined_call_operand.hbm [shape: f32[16,128], index: 0, kind: input, shape index: {}]
  %s1 = inlined_call_operand.hbm [shape: f32[128,128], index: 1, kind: input, shape index: {}]
  %s2 = inlined_call_operand.vmem [shape: f32[1,128], index: 2, kind: input, shape index: {}]
  %s3 = inlined_call_operand.hbm [shape: f32[16,128], index: 3, kind: output, shape index: {}]
  %s4 = sld [smem:[#allocation0]]
  $region30: #{tpu_custom_call.1} parent=0
    _
  %s6 = ssub.s32 1, %s4
  %s7 = scalar_select 0, %s6, %s4
  $region1: #{tpu_custom_call.1} parent=0
    #allocation2 [shape = 'u8[8192]{0}', space=vmem, size = 0x2000, scoped, tag = 'input window, operand 0, single buffered']
    #allocation3 [shape = 's32[1]{0}', space=sflag, size = 0x4, scoped, tag = 'scoped memory for tpu_custom_call.1']
    #allocation4 [shape = 's32[1]{0}', space=sflag, size = 0x4, scoped, tag = 'scoped memory for tpu_custom_call.1']
    #allocation5 [shape = 'u8[65536]{0}', space=vmem, size = 0x10000, scoped, tag = 'input window, operand 1, single buffered']
    #allocation6 [shape = 's32[1]{0}', space=sflag, size = 0x4, scoped, tag = 'scoped memory for tpu_custom_call.1']
    #allocation7 [shape = 'u8[8192]{0}', space=vmem, size = 0x2000, scoped, tag = 'output window, operand 0, single buffered']
    %8 = vsyncpa [#allocation3], 0
    %9 = vsyncpa [#allocation6], 0
    %10 = vsyncpa [#allocation4], 0
    // Predicated region
    $region2: #{tpu_custom_call.1} parent=1 // pred_check
      _
    $region3: #{tpu_custom_call.1} parent=1 // pred_check_branch
      %12 = sbr.rel (0) target = $region5
    $region4: #{tpu_custom_call.1} parent=1 // pred_region
      %s14 = ssub.s32 256, 256
      %15 = vsyncadd [#allocation3], %s14
      %s16 = sshll.u32 [#allocation2], 4
      %s17 = int_to_ptr.vmem [resolvable:$true] %s16
      %22 = dma.hbm_to_vmem [thread:$0]  %s0, 256, %s17, [#allocation3], 128, 128, 8
    $region5: #{tpu_custom_call.1} parent=1 // pred_fallthru
      _
    // Predicated region
    $region6: #{tpu_custom_call.1} parent=1 // pred_check
      _
    $region7: #{tpu_custom_call.1} parent=1 // pred_check_branch
      %24 = sbr.rel (0) target = $region9
    $region8: #{tpu_custom_call.1} parent=1 // pred_region
      %s26 = ssub.s32 2048, 2048
      %27 = vsyncadd [#allocation6], %s26
      %s28 = sshll.u32 [#allocation5], 4
      %s29 = int_to_ptr.vmem [resolvable:$true] %s28
      %34 = dma.hbm_to_vmem [thread:$0]  %s1, 2048, %s29, [#allocation6], 128, 128, 8
    $region9: #{tpu_custom_call.1} parent=1 // pred_fallthru
      _
    // Predicated region
    $region10: #{tpu_custom_call.1} parent=1 // pred_check
      _
    $region11: #{tpu_custom_call.1} parent=1 // pred_check_branch
      %36 = sbr.rel (0) target = $region13
    $region12: #{tpu_custom_call.1} parent=1 // pred_region
      _
    $region13: #{tpu_custom_call.1} parent=1 // pred_fallthru
      _
    // Predicated region
    $region14: #{tpu_custom_call.1} parent=1 // pred_check
      _
    $region15: #{tpu_custom_call.1} parent=1 // pred_check_branch
      %38 = sbr.rel (0) target = $region17
    $region16: #{tpu_custom_call.1} parent=1 // pred_region
      %39 = dma.done [#allocation3], 256
    $region17: #{tpu_custom_call.1} parent=1 // pred_fallthru
      _
    // Predicated region
    $region18: #{tpu_custom_call.1} parent=1 // pred_check
      _
    $region19: #{tpu_custom_call.1} parent=1 // pred_check_branch
      %41 = sbr.rel (0) target = $region21
    $region20: #{tpu_custom_call.1} parent=1 // pred_region
      %42 = dma.done [#allocation6], 2048
    $region21: #{tpu_custom_call.1} parent=1 // pred_fallthru
      _
    %v43 = vld [vmem:[#allocation2] sm:$0xff]
    %v44 = vld [vmem:[#allocation2 + $0x8] sm:$0xff]
    %v45 = vld [vmem:[#allocation5] sm:$0xff]
    %v46 = vld [vmem:[#allocation5 + $0x8] sm:$0xff]
    %v47 = vld [vmem:[#allocation5 + $0x10] sm:$0xff]
    %v48 = vld [vmem:[#allocation5 + $0x18] sm:$0xff]
    %v49 = vld [vmem:[#allocation5 + $0x20] sm:$0xff]
    %v50 = vld [vmem:[#allocation5 + $0x28] sm:$0xff]
    %v51 = vld [vmem:[#allocation5 + $0x30] sm:$0xff]
    %v52 = vld [vmem:[#allocation5 + $0x38] sm:$0xff]
    %v53 = vld [vmem:[#allocation5 + $0x40] sm:$0xff]
    %v54 = vld [vmem:[#allocation5 + $0x48] sm:$0xff]
    %v55 = vld [vmem:[#allocation5 + $0x50] sm:$0xff]
    %v56 = vld [vmem:[#allocation5 + $0x58] sm:$0xff]
    %v57 = vld [vmem:[#allocation5 + $0x60] sm:$0xff]
    %v58 = vld [vmem:[#allocation5 + $0x68] sm:$0xff]
    %v59 = vld [vmem:[#allocation5 + $0x70] sm:$0xff]
    %v60 = vld [vmem:[#allocation5 + $0x78] sm:$0xff]
    %v61 = vld [vmem:[%s2] sm:$0x1]
    %v63 = vlaneseq
    %v64 = vshrl.u32 %v63, 7
    %v65 = vsub.s32 0, %v64
    %v66 = vrot.slane %v61, %v65
    %68 = vmatprep.subr.mxu0 0.0
    %69 = vmatpush1.msra.mxu0 %v60
    %70 = vmatprep.subr.mxu0 0.0
    %71 = vmatpush1.msra.mxu0 %v59
    %72 = vmatprep.subr.mxu0 0.0
    %73 = vmatpush1.msra.mxu0 %v58
    %74 = vmatprep.subr.mxu0 0.0
    %75 = vmatpush1.msra.mxu0 %v57
    %76 = vmatprep.subr.mxu0 0.0
    %77 = vmatpush1.msra.mxu0 %v56
    %78 = vmatprep.subr.mxu0 0.0
    %79 = vmatpush1.msra.mxu0 %v55
    %80 = vmatprep.subr.mxu0 0.0
    %81 = vmatpush1.msra.mxu0 %v54
    %82 = vmatprep.subr.mxu0 0.0
    %83 = vmatpush1.msra.mxu0 %v53
    %84 = vmatprep.subr.mxu0 0.0
    %85 = vmatpush1.msra.mxu0 %v52
    %86 = vmatprep.subr.mxu0 0.0
    %87 = vmatpush1.msra.mxu0 %v51
    %88 = vmatprep.subr.mxu0 0.0
    %89 = vmatpush1.msra.mxu0 %v50
    %90 = vmatprep.subr.mxu0 0.0
    %91 = vmatpush1.msra.mxu0 %v49
    %92 = vmatprep.subr.mxu0 0.0
    %93 = vmatpush1.msra.mxu0 %v48
    %94 = vmatprep.subr.mxu0 0.0
    %95 = vmatpush1.msra.mxu0 %v47
    %96 = vmatprep.subr.mxu0 0.0
    %97 = vmatpush1.msra.mxu0 %v46
    %98 = vmatprep.subr.mxu0 0.0
    %99 = vmatpush1.msra.mxu0 %v45
    %100 = vmatprep.subr.mxu0 0.0
    %101 = vmatpush2.msra.mxu0 0.0
    %102 = vmatprep.subr.mxu0 0.0
    %103 = vmatpush2.msra.mxu0 0.0
    %104 = vmatprep.subr.mxu0 0.0
    %105 = vmatpush2.msra.mxu0 0.0
    %106 = vmatprep.subr.mxu0 0.0
    %107 = vmatpush2.msra.mxu0 0.0
    %108 = vmatprep.subr.mxu0 0.0
    %109 = vmatpush2.msra.mxu0 0.0
    %110 = vmatprep.subr.mxu0 0.0
    %111 = vmatpush2.msra.mxu0 0.0
    %112 = vmatprep.subr.mxu0 0.0
    %113 = vmatpush2.msra.mxu0 0.0
    %114 = vmatprep.subr.mxu0 0.0
    %115 = vmatpush2.msra.mxu0 0.0
    %116 = vmatprep.subr.mxu0 0.0
    %117 = vmatpush2.msra.mxu0 0.0
    %118 = vmatprep.subr.mxu0 0.0
    %119 = vmatpush2.msra.mxu0 0.0
    %120 = vmatprep.subr.mxu0 0.0
    %121 = vmatpush2.msra.mxu0 0.0
    %122 = vmatprep.subr.mxu0 0.0
    %123 = vmatpush2.msra.mxu0 0.0
    %124 = vmatprep.subr.mxu0 0.0
    %125 = vmatpush2.msra.mxu0 0.0
    %126 = vmatprep.subr.mxu0 0.0
    %127 = vmatpush2.msra.mxu0 0.0
    %128 = vmatprep.subr.mxu0 0.0
    %129 = vmatpush2.msra.mxu0 0.0
    %130 = vmatprep.subr.mxu0 0.0
    %131 = vmatpush2.msra.mxu0 0.0
    %132 = vmatprep.mubr.f32.mxu0 0.0
    %133 = vmatmul.mubr.f32.gmra.mxu0 %v43
    %v134 = vpop.f32.mrf.mxu0
    %v135 = vadd.f32 %v66, %v134
    %v136 = vpop.f32.mrf.mxu0
    %137 = vmatprep.mubr.f32.mxu0 0.0
    %138 = vmatmul.mubr.f32.gmra.mxu0 %v44
    %v139 = vpop.f32.mrf.mxu0
    %v140 = vadd.f32 %v66, %v139
    %v141 = vpop.f32.mrf.mxu0
    %142 = vdwg.mxu0
    %143 = vst [vmem:[#allocation7] sm:$0xff] %v135
    %144 = vst [vmem:[#allocation7 + $0x8] sm:$0xff] %v140
    // Predicated region
    $region22: #{tpu_custom_call.1} parent=1 // pred_check
      _
    $region23: #{tpu_custom_call.1} parent=1 // pred_check_branch
      %146 = sbr.rel (0) target = $region25
    $region24: #{tpu_custom_call.1} parent=1 // pred_region
      %s148 = ssub.s32 256, 256
      %149 = vsyncadd [#allocation4], %s148
      %s150 = sshll.u32 [#allocation7], 4
      %s151 = int_to_ptr.vmem [resolvable:$true] %s150
      %156 = dma.vmem_to_hbm [thread:$0]  %s151, 256, %s3, [#allocation4], 128, 128, 8
    $region25: #{tpu_custom_call.1} parent=1 // pred_fallthru
      _
    // Predicated region
    $region26: #{tpu_custom_call.1} parent=1 // pred_check
      _
    $region27: #{tpu_custom_call.1} parent=1 // pred_check_branch
      %158 = sbr.rel (0) target = $region29
    $region28: #{tpu_custom_call.1} parent=1 // pred_region
      %159 = dma.done [#allocation4], 256
    $region29: #{tpu_custom_call.1} parent=1 // pred_fallthru
      _
    %160 = vsyncpa [#allocation3], 1
    %161 = vsyncpa [#allocation6], 1
    %162 = vsyncpa [#allocation4], 1

</llo_original>
